<compile_context>
chip_gen: v7x
topology: tpu7x:2x2x1
jax: 0.10.0
libtpu: 0.0.40
codegen_flags: <defaults>
</compile_context>

<pallas_src>
import functools

import jax
import jax.numpy as jnp
from jax.experimental import pallas as pl
from jax.experimental.pallas import tpu as pltpu


def _round_up(x: int, m: int) -> int:
    return (x + m - 1) // m * m


def _resident_spec(shape):
    """BlockSpec for a grid-invariant operand (weights / biases).

    The constant index_map means the DMA only runs once; Buffered(1) drops the
    second, never-used pipeline buffer so the operand's VMEM footprint halves.
    Falls back to a plain spec on jax versions without pipeline_mode.
    """
    index_map = lambda i: (0,) * len(shape)
    try:
        return pl.BlockSpec(shape, index_map, pipeline_mode=pl.Buffered(1))
    except Exception:  # older jax without pipeline_mode / Buffered
        return pl.BlockSpec(shape, index_map)


def adapter_kernel(x_ref, wd_ref, bd_ref, wu_ref, bu_ref, o_ref, *, h_chunk):
    """Fused adapter block on one [tm, Hp] tile of rows.

    x_ref : [tm, Hp]  input hidden-state tile (native dtype)
    wd_ref: [Hp, Ap]  down-projection weight (pre-transposed, resident)
    bd_ref: [1,  Ap]  down-projection bias (f32)
    wu_ref: [Ap, Hp]  up-projection weight (pre-transposed, resident)
    bu_ref: [1,  Hp]  up-projection bias (f32)
    o_ref : [tm, Hp]  output tile (x + adapter(x))
    """
    # Down projection -> [tm, Ap]; native-dtype MXU operands, f32 accumulate.
    h = jnp.dot(x_ref[...], wd_ref[...], preferred_element_type=jnp.float32)
    h = h + bd_ref[...]
    # tanh-approx GELU: the transcendental lands on the EUP slot.
    # TODO(synk): exact-erf GELU variant if the config requests torch's default.
    h = jax.nn.gelu(h, approximate=True).astype(wu_ref.dtype)

    # Up projection, chunked along the output (hidden) dim: keeps the live f32
    # slab small and lets the bias/residual/store epilogue of chunk k overlap
    # the MXU push of chunk k+1.
    hp = o_ref.shape[1]
    for c0 in range(0, hp, h_chunk):               # static, fully unrolled
        cw = min(h_chunk, hp - c0)
        u = jnp.dot(h, wu_ref[:, c0:c0 + cw], preferred_element_type=jnp.float32)
        u = u + bu_ref[:, c0:c0 + cw]
        # Residual in f32, single rounding to the output dtype.
        res = x_ref[:, c0:c0 + cw].astype(jnp.float32) + u
        o_ref[:, c0:c0 + cw] = res.astype(o_ref.dtype)


@functools.partial(jax.jit, static_argnames=("tm", "donate_x"))
def adapter_block(hidden_states, w_down, b_down, w_up, b_up, *, tm=1024,
                  donate_x=False):
    """hidden_states: [B, S, H]; weights pre-transposed to [in, out] layout."""
    B, S, H = hidden_states.shape
    A = w_down.shape[1]
    M = B * S
    dtype = hidden_states.dtype
    itemsize = jnp.dtype(dtype).itemsize

    # Lane-pad feature dims to 128 (no-op for production BERT sizes). The row
    # dim M is never padded: rows are independent, so the ragged last tile's
    # out-of-bounds reads only feed rows whose writes Pallas drops.
    Hp = _round_up(H, 128)
    Ap = _round_up(A, 128)

    # Row tile: as large as useful, but keep >= ~8 grid steps so the
    # "parallel" axis can shard across both v7x TensorCores and the DMA
    # pipeline has depth; never below 256 rows (mem-bound roofline) unless M
    # itself is smaller; always a multiple of 8.
    full = _round_up(max(M, 1), 8)
    cap = max(_round_up(pl.cdiv(M, 8), 8), 256)
    tm = min(_round_up(max(int(tm), 8), 8), cap, full)
    grid = (pl.cdiv(M, tm),)

    h_chunk = min(512, Hp)

    x2d = hidden_states.reshape(M, H)
    if Hp != H:
        x2d = jnp.pad(x2d, ((0, 0), (0, Hp - H)))
    wd = w_down if (Hp, Ap) == (H, A) else jnp.pad(w_down, ((0, Hp - H), (0, Ap - A)))
    wu = w_up if (Ap, Hp) == (A, H) else jnp.pad(w_up, ((0, Ap - A), (0, Hp - H)))
    bd = jnp.pad(b_down, (0, Ap - A)).astype(jnp.float32).reshape(1, Ap)
    bu = jnp.pad(b_up, (0, Hp - H)).astype(jnp.float32).reshape(1, Hp)

    # Explicit VMEM budget: double-buffered x/out row tiles, (single-buffered)
    # weights, f32 intermediates, plus margin for Mosaic internal scratch.
    vmem_bytes = (
        4 * tm * Hp * itemsize            # x + out, double-buffered
        + 2 * 2 * Hp * Ap * itemsize      # weights (2x in case Buffered(1) unavailable)
        + 2 * (Ap + Hp) * 4               # f32 biases
        + tm * Ap * 4                     # f32 down-projection intermediate
        + tm * h_chunk * 4                # f32 up-projection chunk
    )
    vmem_limit = min(max(int(vmem_bytes * 1.25) + (4 << 20), 16 << 20), 64 << 20)

    cost = pl.CostEstimate(
        flops=4 * M * Hp * Ap,                       # two matmuls
        transcendentals=M * Ap,                      # tanh in GELU
        bytes_accessed=(2 * M * Hp + 2 * Hp * Ap) * itemsize + (Ap + Hp) * 4,
    )

    out2d = pl.pallas_call(
        functools.partial(adapter_kernel, h_chunk=h_chunk),
        out_shape=jax.ShapeDtypeStruct((M, Hp), dtype),
        grid_spec=pltpu.PrefetchScalarGridSpec(
            num_scalar_prefetch=0,
            grid=grid,
            in_specs=[
                pl.BlockSpec((tm, Hp), lambda i: (i, 0)),   # x row tile (pipelined)
                _resident_spec((Hp, Ap)),                   # W_down (resident, 1 buf)
                _resident_spec((1, Ap)),                    # b_down (f32)
                _resident_spec((Ap, Hp)),                   # W_up (resident, 1 buf)
                _resident_spec((1, Hp)),                    # b_up (f32)
            ],
            out_specs=pl.BlockSpec((tm, Hp), lambda i: (i, 0)),
        ),
        compiler_params=pltpu.CompilerParams(
            dimension_semantics=("parallel",),
            vmem_limit_bytes=vmem_limit),
        cost_estimate=cost,
        input_output_aliases={0: 0} if donate_x else {},
    )(x2d, wd, bd, wu, bu)

    if Hp != H:
        out2d = out2d[:, :H]
    return out2d.reshape(B, S, H)


def init_adapter_params(key, hidden_dim, adapter_dim, initializer_range,
                        dtype=jnp.float32):
    """Mirrors AdapterBlock.__init__: weights ~ Normal(0, initializer_range),
    biases = 0.  PyTorch nn.Linear stores weight as [out, in]; we keep the
    mathematically equivalent transposed [in, out] layout for the kernel."""
    k1, k2 = jax.random.split(key)
    w_down = (jax.random.normal(k1, (hidden_dim, adapter_dim), jnp.float32)
              * initializer_range).astype(dtype)
    b_down = jnp.zeros((adapter_dim,), dtype)
    w_up = (jax.random.normal(k2, (adapter_dim, hidden_dim), jnp.float32)
            * initializer_range).astype(dtype)
    b_up = jnp.zeros((hidden_dim,), dtype)
    return w_down, b_down, w_up, b_up


def adapter_ref(x, w_down, b_down, w_up, b_up):
    """Pure-JAX reference for validation."""
    h = jnp.einsum("bsh,ha->bsa", x, w_down) + b_down
    h = jax.nn.gelu(h, approximate=True)
    u = jnp.einsum("bsa,ah->bsh", h, w_up) + b_up
    return x + u


if __name__ == "__main__":
    # AdapterConfig(hidden_dim=32, adapter_dim=16, adapter_act=gelu,
    #               adapter_initializer_range=0.02)
    batch, seq, hidden_dim, adapter_dim = 2, 8, 32, 16
    init_range = 0.02

    key = jax.random.PRNGKey(0)
    k_x, k_p = jax.random.split(key)
    hidden_states = jax.random.normal(k_x, (batch, seq, hidden_dim), jnp.float32)
    w_down, b_down, w_up, b_up = init_adapter_params(
        k_p, hidden_dim, adapter_dim, init_range)

    # tm=8 -> grid of 2 row tiles at these toy shapes (exercises the pipeline);
    # the default tm=1024 (clamped by the grid/roofline caps) is the production
    # setting for real BERT sizes.
    out = adapter_block(hidden_states, w_down, b_down, w_up, b_up, tm=8)
    out = jax.block_until_ready(out)

    ref = adapter_ref(hidden_states, w_down, b_down, w_up, b_up)
    assert out.shape == hidden_states.shape
    assert jnp.allclose(out, ref, atol=1e-5, rtol=1e-5), "mismatch vs reference"

    # Ragged last row tile (M=13 not a multiple of tm=8): validates the
    # un-padded row dimension introduced by the perf review.
    hs2 = jax.random.normal(jax.random.PRNGKey(1), (1, 13, hidden_dim), jnp.float32)
    out2 = jax.block_until_ready(
        adapter_block(hs2, w_down, b_down, w_up, b_up, tm=8))
    ref2 = adapter_ref(hs2, w_down, b_down, w_up, b_up)
    assert jnp.allclose(out2, ref2, atol=1e-5, rtol=1e-5), "ragged-tile mismatch"

    print("KERNEL_OK")
</pallas_src>

<mosaic_0001>
module attributes {stable_mosaic.version = 11 : i64} {
  func.func @adapter_kernel(%arg0: i32, %arg1: memref<8x128xf32, #tpu.memory_space<vmem>>, %arg2: memref<128x128xf32, #tpu.memory_space<vmem>>, %arg3: memref<1x128xf32, #tpu.memory_space<vmem>>, %arg4: memref<128x128xf32, #tpu.memory_space<vmem>>, %arg5: memref<1x128xf32, #tpu.memory_space<vmem>>, %arg6: memref<8x128xf32, #tpu.memory_space<vmem>>) attributes {dimension_semantics = [#tpu.dimension_semantics<parallel>], iteration_bounds = array<i64: 2>, scalar_prefetch = 0 : i64, scratch_operands = 0 : i64, tpu.core_type = #tpu.core_type<tc>, window_params = [{transform_indices = @transform_0, window_bounds = array<i64: 8, 128>}, {pipeline_mode = #tpu.pipeline_mode<synchronous>, transform_indices = @transform_1, window_bounds = array<i64: 128, 128>}, {pipeline_mode = #tpu.pipeline_mode<synchronous>, transform_indices = @transform_2, window_bounds = array<i64: 1, 128>}, {pipeline_mode = #tpu.pipeline_mode<synchronous>, transform_indices = @transform_3, window_bounds = array<i64: 128, 128>}, {pipeline_mode = #tpu.pipeline_mode<synchronous>, transform_indices = @transform_4, window_bounds = array<i64: 1, 128>}, {transform_indices = @transform_5, window_bounds = array<i64: 8, 128>}]} {
    %c0 = arith.constant 0 : index
    %c0_0 = arith.constant 0 : index
    %0 = vector.load %arg1[%c0, %c0_0] : memref<8x128xf32, #tpu.memory_space<vmem>>, vector<8x128xf32>
    %c0_1 = arith.constant 0 : index
    %c0_2 = arith.constant 0 : index
    %1 = vector.load %arg2[%c0_1, %c0_2] : memref<128x128xf32, #tpu.memory_space<vmem>>, vector<128x128xf32>
    %cst = arith.constant dense<0.000000e+00> : vector<8x128xf32>
    %2 = tpu.matmul %0, %1, %cst {dimension_numbers = #tpu.dot_dimension_numbers<[1], [0], [0], [1], [0, 0, 1, 1], [], []>} : vector<8x128xf32>, vector<128x128xf32>, vector<8x128xf32> -> vector<8x128xf32>
    %c0_3 = arith.constant 0 : index
    %c0_4 = arith.constant 0 : index
    %3 = vector.load %arg3[%c0_3, %c0_4] : memref<1x128xf32, #tpu.memory_space<vmem>>, vector<1x128xf32>
    %4 = vector.broadcast %3 : vector<1x128xf32> to vector<8x128xf32>
    %5 = arith.addf %2, %4 : vector<8x128xf32>
    %6 = arith.mulf %5, %5 : vector<8x128xf32>
    %7 = arith.mulf %5, %6 : vector<8x128xf32>
    %cst_5 = arith.constant 4.471500e-02 : f32
    %8 = vector.broadcast %cst_5 : f32 to vector<8x128xf32>
    %9 = arith.mulf %8, %7 : vector<8x128xf32>
    %10 = arith.addf %5, %9 : vector<8x128xf32>
    %cst_6 = arith.constant 0.797884583 : f32
    %11 = vector.broadcast %cst_6 : f32 to vector<8x128xf32>
    %12 = arith.mulf %11, %10 : vector<8x128xf32>
    %13 = math.tanh %12 : vector<8x128xf32>
    %cst_7 = arith.constant 1.000000e+00 : f32
    %14 = vector.broadcast %cst_7 : f32 to vector<8x128xf32>
    %15 = arith.addf %14, %13 : vector<8x128xf32>
    %cst_8 = arith.constant 5.000000e-01 : f32
    %16 = vector.broadcast %cst_8 : f32 to vector<8x128xf32>
    %17 = arith.mulf %16, %15 : vector<8x128xf32>
    %18 = arith.mulf %5, %17 : vector<8x128xf32>
    %c0_9 = arith.constant 0 : index
    %c0_10 = arith.constant 0 : index
    %19 = vector.load %arg4[%c0_9, %c0_10] : memref<128x128xf32, #tpu.memory_space<vmem>>, vector<128x128xf32>
    %cst_11 = arith.constant dense<0.000000e+00> : vector<8x128xf32>
    %20 = tpu.matmul %18, %19, %cst_11 {dimension_numbers = #tpu.dot_dimension_numbers<[1], [0], [0], [1], [0, 0, 1, 1], [], []>} : vector<8x128xf32>, vector<128x128xf32>, vector<8x128xf32> -> vector<8x128xf32>
    %c0_12 = arith.constant 0 : index
    %c0_13 = arith.constant 0 : index
    %21 = vector.load %arg5[%c0_12, %c0_13] : memref<1x128xf32, #tpu.memory_space<vmem>>, vector<1x128xf32>
    %22 = vector.broadcast %21 : vector<1x128xf32> to vector<8x128xf32>
    %23 = arith.addf %20, %22 : vector<8x128xf32>
    %c0_14 = arith.constant 0 : index
    %c0_15 = arith.constant 0 : index
    %24 = vector.load %arg1[%c0_14, %c0_15] : memref<8x128xf32, #tpu.memory_space<vmem>>, vector<8x128xf32>
    %25 = arith.addf %24, %23 : vector<8x128xf32>
    %c0_16 = arith.constant 0 : index
    %c0_17 = arith.constant 0 : index
    %26 = vector.load %arg6[%c0_16, %c0_17] : memref<8x128xf32, #tpu.memory_space<vmem>>, vector<8x128xf32>
    tpu.vector_store %arg6[%c0_16, %c0_17], %25 {strides = array<i32>} : memref<8x128xf32, #tpu.memory_space<vmem>>, vector<8x128xf32>,
    return
  }
  func.func @transform_0(%arg0: i32) -> (i32, i32) {
    %c0_i32 = arith.constant 0 : i32
    %c0_i32_0 = arith.constant 0 : i32
    return %arg0, %c0_i32 : i32, i32
  }
  func.func @transform_1(%arg0: i32) -> (i32, i32) {
    %c0_i32 = arith.constant 0 : i32
    %c0_i32_0 = arith.constant 0 : i32
    %c0_i32_1 = arith.constant 0 : i32
    return %c0_i32, %c0_i32_0 : i32, i32
  }
  func.func @transform_2(%arg0: i32) -> (i32, i32) {
    %c0_i32 = arith.constant 0 : i32
    %c0_i32_0 = arith.constant 0 : i32
    %c0_i32_1 = arith.constant 0 : i32
    return %c0_i32, %c0_i32_0 : i32, i32
  }
  func.func @transform_3(%arg0: i32) -> (i32, i32) {
    %c0_i32 = arith.constant 0 : i32
    %c0_i32_0 = arith.constant 0 : i32
    %c0_i32_1 = arith.constant 0 : i32
    return %c0_i32, %c0_i32_0 : i32, i32
  }
  func.func @transform_4(%arg0: i32) -> (i32, i32) {
    %c0_i32 = arith.constant 0 : i32
    %c0_i32_0 = arith.constant 0 : i32
    %c0_i32_1 = arith.constant 0 : i32
    return %c0_i32, %c0_i32_0 : i32, i32
  }
  func.func @transform_5(%arg0: i32) -> (i32, i32) {
    %c0_i32 = arith.constant 0 : i32
    %c0_i32_0 = arith.constant 0 : i32
    return %arg0, %c0_i32 : i32, i32
  }
}

</mosaic_0001>

<llo_original>
// kernel: adapter_block.1
$region0: #{adapter_block.1}
  #allocation0 [shape = 'u32[]', space=smem, size = 0x4, offset = 0x4, fixed_abs, tag = 'smem constant byte address 0x4 - core index']
  #allocation1 [shape = 'u32[144,128]{1,0:T(1,128)}', space=vmem, size = 0x12000, scoped, tag = 'internal scratch']
  %s0 = inlined_call_operand.vmem [shape: f32[16,128], index: 0, kind: input, shape index: {}]
  %s1 = inlined_call_operand.vmem [shape: f32[128,128], index: 1, kind: input, shape index: {}]
  %s2 = inlined_call_operand.vmem [shape: f32[1,128], index: 2, kind: input, shape index: {}]
  %s3 = inlined_call_operand.vmem [shape: f32[128,128], index: 3, kind: input, shape index: {}]
  %s4 = inlined_call_operand.vmem [shape: f32[1,128], index: 4, kind: input, shape index: {}]
  %s5 = inlined_call_operand.vmem [shape: f32[16,128], index: 5, kind: output, shape index: {}]
  %s6 = sld [smem:[#allocation0]]
  $region53: #{adapter_block.1} parent=0
    _
  %s8 = ssub.s32 1, %s6
  %s9 = scalar_select 0, %s8, %s6
  loop: start=0, step=1, limit=4
  $region2: #{adapter_block.1} parent=0 // loop_pre_header
    _
  $region3: #{adapter_block.1} parent=0 // loop_header
    %s11 = sphi 0, %s15
    %p12 = scmp.ge.s32.totalorder %s11, 4
    %s21 = sphi 0, %s23
    %s24 = sphi 0, %s21
    %s25 = sphi 0, %s24
    %s41 = sphi 0, %s25
    %s45 = sphi 0, %s45
    %s47 = sphi 0, %s45
    %s48 = sphi 0, %s47
    %s62 = sphi 0, %s48
    %s66 = sphi 0, %s66
    %s68 = sphi 0, %s66
    %s69 = sphi 0, %s68
    %s83 = sphi 0, %s69
    %s87 = sphi 0, %s87
    %s89 = sphi 0, %s87
    %s90 = sphi 0, %s89
    %s104 = sphi 0, %s90
    %s108 = sphi 0, %s108
    %s110 = sphi 0, %s108
    %s111 = sphi 0, %s110
    %s125 = sphi 0, %s111
    %s131 = sphi 0, %s133
    %s134 = sphi 0, %s131
    %s135 = sphi 0, %s134
    %s151 = sphi 0, %s135
  $region4: #{adapter_block.1} parent=0 // loop_header_branch
    %14 = sbr.rel (%p12) target = $region8
  $region5: #{adapter_block.1} parent=0 // loop_body
    %s16 = ssub.s32 %s11, 1
    %s17 = ssub.s32 %s11, 2
    %s18 = sadd.s32 %s11, 1
    %s19 = ssub.s32 %s11, %s18
    %p20 = scmp.eq.s32.totalorder %s19, 0
    %s22 = sadd.s32 %s21, 1
    %s23 = scalar_select %p20, %s21, %s22
    %p26 = pneg %p20
    %p27 = scmp.eq.s32.totalorder %s11, 1
    %p28 = por %p26, %p27
    %p29 = scmp.ne.s32.totalorder %s21, %s24
    %p30 = scmp.eq.s32.totalorder %s11, 0
    %p31 = por %p29, %p30
    %p32 = scmp.ne.s32.totalorder %s21, %s24
    %p33 = scmp.eq.s32.totalorder %s16, 1
    %p34 = por %p32, %p33
    %p35 = scmp.ne.s32.totalorder %s24, %s25
    %p36 = scmp.eq.s32.totalorder %s16, 0
    %p37 = por %p35, %p36
    %p38 = scmp.ne.s32.totalorder %s24, %s25
    %p39 = scmp.eq.s32.totalorder %s17, 1
    %p40 = por %p38, %p39
    %p42 = scmp.ne.s32.totalorder %s25, %s41
    %p43 = scmp.eq.s32.totalorder %s17, 0
    %p44 = por %p42, %p43
    %s46 = sadd.s32 %s45, 1
    %p49 = scmp.eq.s32.totalorder %s11, 1
    %p50 = scmp.ne.s32.totalorder %s45, %s47
    %p51 = scmp.eq.s32.totalorder %s11, 0
    %p52 = por %p50, %p51
    %p53 = scmp.ne.s32.totalorder %s45, %s47
    %p54 = scmp.eq.s32.totalorder %s16, 1
    %p55 = por %p53, %p54
    %p56 = scmp.ne.s32.totalorder %s47, %s48
    %p57 = scmp.eq.s32.totalorder %s16, 0
    %p58 = por %p56, %p57
    %p59 = scmp.ne.s32.totalorder %s47, %s48
    %p60 = scmp.eq.s32.totalorder %s17, 1
    %p61 = por %p59, %p60
    %p63 = scmp.ne.s32.totalorder %s48, %s62
    %p64 = scmp.eq.s32.totalorder %s17, 0
    %p65 = por %p63, %p64
    %s67 = sadd.s32 %s66, 1
    %p70 = scmp.eq.s32.totalorder %s11, 1
    %p71 = scmp.ne.s32.totalorder %s66, %s68
    %p72 = scmp.eq.s32.totalorder %s11, 0
    %p73 = por %p71, %p72
    %p74 = scmp.ne.s32.totalorder %s66, %s68
    %p75 = scmp.eq.s32.totalorder %s16, 1
    %p76 = por %p74, %p75
    %p77 = scmp.ne.s32.totalorder %s68, %s69
    %p78 = scmp.eq.s32.totalorder %s16, 0
    %p79 = por %p77, %p78
    %p80 = scmp.ne.s32.totalorder %s68, %s69
    %p81 = scmp.eq.s32.totalorder %s17, 1
    %p82 = por %p80, %p81
    %p84 = scmp.ne.s32.totalorder %s69, %s83
    %p85 = scmp.eq.s32.totalorder %s17, 0
    %p86 = por %p84, %p85
    %s88 = sadd.s32 %s87, 1
    %p91 = scmp.eq.s32.totalorder %s11, 1
    %p92 = scmp.ne.s32.totalorder %s87, %s89
    %p93 = scmp.eq.s32.totalorder %s11, 0
    %p94 = por %p92, %p93
    %p95 = scmp.ne.s32.totalorder %s87, %s89
    %p96 = scmp.eq.s32.totalorder %s16, 1
    %p97 = por %p95, %p96
    %p98 = scmp.ne.s32.totalorder %s89, %s90
    %p99 = scmp.eq.s32.totalorder %s16, 0
    %p100 = por %p98, %p99
    %p101 = scmp.ne.s32.totalorder %s89, %s90
    %p102 = scmp.eq.s32.totalorder %s17, 1
    %p103 = por %p101, %p102
    %p105 = scmp.ne.s32.totalorder %s90, %s104
    %p106 = scmp.eq.s32.totalorder %s17, 0
    %p107 = por %p105, %p106
    %s109 = sadd.s32 %s108, 1
    %p112 = scmp.eq.s32.totalorder %s11, 1
    %p113 = scmp.ne.s32.totalorder %s108, %s110
    %p114 = scmp.eq.s32.totalorder %s11, 0
    %p115 = por %p113, %p114
    %p116 = scmp.ne.s32.totalorder %s108, %s110
    %p117 = scmp.eq.s32.totalorder %s16, 1
    %p118 = por %p116, %p117
    %p119 = scmp.ne.s32.totalorder %s110, %s111
    %p120 = scmp.eq.s32.totalorder %s16, 0
    %p121 = por %p119, %p120
    %p122 = scmp.ne.s32.totalorder %s110, %s111
    %p123 = scmp.eq.s32.totalorder %s17, 1
    %p124 = por %p122, %p123
    %p126 = scmp.ne.s32.totalorder %s111, %s125
    %p127 = scmp.eq.s32.totalorder %s17, 0
    %p128 = por %p126, %p127
    %s129 = ssub.s32 %s11, %s18
    %p130 = scmp.eq.s32.totalorder %s129, 0
    %s132 = sadd.s32 %s131, 1
    %s133 = scalar_select %p130, %s131, %s132
    %p136 = pneg %p130
    %p137 = scmp.eq.s32.totalorder %s11, 1
    %p138 = por %p136, %p137
    %p139 = scmp.ne.s32.totalorder %s131, %s134
    %p140 = scmp.eq.s32.totalorder %s11, 0
    %p141 = por %p139, %p140
    %p142 = scmp.ne.s32.totalorder %s131, %s134
    %p143 = scmp.eq.s32.totalorder %s16, 1
    %p144 = por %p142, %p143
    %p145 = scmp.ne.s32.totalorder %s134, %s135
    %p146 = scmp.eq.s32.totalorder %s16, 0
    %p147 = por %p145, %p146
    %p148 = scmp.ne.s32.totalorder %s134, %s135
    %p149 = scmp.eq.s32.totalorder %s17, 1
    %p150 = por %p148, %p149
    %p152 = scmp.ne.s32.totalorder %s135, %s151
    %p153 = scmp.eq.s32.totalorder %s17, 0
    %p154 = por %p152, %p153
    %p155 = scmp.le.s32.totalorder 1, %s11
    %p156 = scmp.lt.s32.totalorder %s11, 3
    %p157 = pnand %p155, %p156
    %p158 = pneg %p157
    // Predicated region
    $region9: #{adapter_block.1} parent=5 // pred_check
      _
    $region10: #{adapter_block.1} parent=5 // pred_check_branch
      %160 = sbr.rel (%p157) target = $region12
    $region11: #{adapter_block.1} parent=5 // pred_region
      %s161 = ssub.s32 %s11, 1
      // Predicated region
      $region13: #{adapter_block.1} parent=11 // pred_check
        %p162 = pneg %p58
      $region14: #{adapter_block.1} parent=11 // pred_check_branch
        %164 = sbr.rel (%p162) target = $region16
      $region15: #{adapter_block.1} parent=11 // pred_region
        _
      $region16: #{adapter_block.1} parent=11 // pred_fallthru
        _
      // Predicated region
      $region17: #{adapter_block.1} parent=11 // pred_check
        %p165 = pneg %p79
      $region18: #{adapter_block.1} parent=11 // pred_check_branch
        %167 = sbr.rel (%p165) target = $region20
      $region19: #{adapter_block.1} parent=11 // pred_region
        _
      $region20: #{adapter_block.1} parent=11 // pred_fallthru
        _
      // Predicated region
      $region21: #{adapter_block.1} parent=11 // pred_check
        %p168 = pneg %p100
      $region22: #{adapter_block.1} parent=11 // pred_check_branch
        %170 = sbr.rel (%p168) target = $region24
      $region23: #{adapter_block.1} parent=11 // pred_region
        _
      $region24: #{adapter_block.1} parent=11 // pred_fallthru
        _
      // Predicated region
      $region25: #{adapter_block.1} parent=11 // pred_check
        %p171 = pneg %p121
      $region26: #{adapter_block.1} parent=11 // pred_check_branch
        %173 = sbr.rel (%p171) target = $region28
      $region27: #{adapter_block.1} parent=11 // pred_region
        _
      $region28: #{adapter_block.1} parent=11 // pred_fallthru
        _
    $region12: #{adapter_block.1} parent=5 // pred_fallthru
      _
    %p174 = scmp.lt.s32.totalorder %s11, 2
    // Predicated region
    $region29: #{adapter_block.1} parent=5 // pred_check
      %p175 = pneg %p174
    $region30: #{adapter_block.1} parent=5 // pred_check_branch
      %177 = sbr.rel (%p175) target = $region32
    $region31: #{adapter_block.1} parent=5 // pred_region
      // Predicated region
      $region33: #{adapter_block.1} parent=31 // pred_check
        %p178 = pneg %p31
      $region34: #{adapter_block.1} parent=31 // pred_check_branch
        %180 = sbr.rel (%p178) target = $region36
      $region35: #{adapter_block.1} parent=31 // pred_region
        %p181 = scmp.lt.s32.totalorder %s11, 1
        %s182 = scalar_select %p181, %s11, 1
        %s183 = smul.addr %s182, 8
        %s184 = scalar_lea.vmem %s0, %s183
      $region36: #{adapter_block.1} parent=31 // pred_fallthru
        _
    $region32: #{adapter_block.1} parent=5 // pred_fallthru
      _
    %p185 = scmp.le.s32.totalorder 1, %s11
    %p186 = scmp.lt.s32.totalorder %s11, 3
    %p187 = pnand %p185, %p186
    %p188 = pneg %p187
    // Predicated region
    $region37: #{adapter_block.1} parent=5 // pred_check
      _
    $region38: #{adapter_block.1} parent=5 // pred_check_branch
      %190 = sbr.rel (%p187) target = $region40
    $region39: #{adapter_block.1} parent=5 // pred_region
      %s191 = ssub.s32 %s11, 1
      %p192 = scmp.lt.s32.totalorder %s16, 1
      %s193 = scalar_select %p192, %s16, 1
      %s194 = smul.addr %s193, 8
      %s195 = scalar_lea.vmem %s0, %s194
      %p196 = pneg %p37
      %p197 = pneg %p34
      %p198 = pneg %p58
      %p199 = pneg %p55
      %p200 = pneg %p79
      %p201 = pneg %p76
      %p202 = pneg %p100
      %p203 = pneg %p97
      %p204 = pneg %p121
      %p205 = pneg %p118
      %p206 = pneg %p147
      %p207 = pneg %p144
      %p208 = scmp.lt.s32.totalorder %s16, 1
      %s209 = scalar_select %p208, %s16, 1
      %s210 = smul.addr %s209, 8
      %s211 = scalar_lea.vmem %s5, %s210
      %p212 = scmp.lt.s32.totalorder %s16, 1
      %s213 = scalar_select %p212, %s16, 1
      %s214 = smul.addr %s213, 8
      %s215 = scalar_lea.vmem %s0, %s214
      %p216 = scmp.lt.s32.totalorder %s16, 1
      %s217 = scalar_select %p216, %s16, 1
      %s218 = smul.addr %s217, 8
      %s219 = scalar_lea.vmem %s5, %s218
      %v220 = vld [vmem:[%s215] sm:$0xff]
      %v221 = vld [vmem:[%s1] sm:$0xff]
      %v222 = vld [vmem:[%s1 + $0x8] sm:$0xff]
      %v223 = vld [vmem:[%s1 + $0x10] sm:$0xff]
      %v224 = vld [vmem:[%s1 + $0x18] sm:$0xff]
      %v225 = vld [vmem:[%s1 + $0x20] sm:$0xff]
      %v226 = vld [vmem:[%s1 + $0x28] sm:$0xff]
      %v227 = vld [vmem:[%s1 + $0x30] sm:$0xff]
      %v228 = vld [vmem:[%s1 + $0x38] sm:$0xff]
      %v229 = vld [vmem:[%s1 + $0x40] sm:$0xff]
      %v230 = vld [vmem:[%s1 + $0x48] sm:$0xff]
      %v231 = vld [vmem:[%s1 + $0x50] sm:$0xff]
      %v232 = vld [vmem:[%s1 + $0x58] sm:$0xff]
      %v233 = vld [vmem:[%s1 + $0x60] sm:$0xff]
      %v234 = vld [vmem:[%s1 + $0x68] sm:$0xff]
      %v235 = vld [vmem:[%s1 + $0x70] sm:$0xff]
      %v236 = vld [vmem:[%s1 + $0x78] sm:$0xff]
      %v237 = vld [vmem:[%s2] sm:$0x1]
      %v239 = vlaneseq
      %v240 = vshrl.u32 %v239, 7
      %v241 = vsub.s32 0, %v240
      %v242 = vrot.slane %v237, %v241
      %244 = vmatprep.subr.mxu0 0.0
      %245 = vmatpush1.msra.mxu0 %v221
      %246 = vmatprep.subr.mxu0 0.0
      %247 = vmatpush1.msra.mxu0 %v222
      %248 = vmatprep.subr.mxu0 0.0
      %249 = vmatpush1.msra.mxu0 %v223
      %250 = vmatprep.subr.mxu0 0.0
      %251 = vmatpush1.msra.mxu0 %v224
      %252 = vmatprep.subr.mxu0 0.0
      %253 = vmatpush1.msra.mxu0 %v225
      %254 = vmatprep.subr.mxu0 0.0
      %255 = vmatpush1.msra.mxu0 %v226
      %256 = vmatprep.subr.mxu0 0.0
      %257 = vmatpush1.msra.mxu0 %v227
      %258 = vmatprep.subr.mxu0 0.0
      %259 = vmatpush1.msra.mxu0 %v228
      %260 = vmatprep.subr.mxu0 0.0
      %261 = vmatpush1.msra.mxu0 %v229
      %262 = vmatprep.subr.mxu0 0.0
      %263 = vmatpush1.msra.mxu0 %v230
      %264 = vmatprep.subr.mxu0 0.0
      %265 = vmatpush1.msra.mxu0 %v231
      %266 = vmatprep.subr.mxu0 0.0
      %267 = vmatpush1.msra.mxu0 %v232
      %268 = vmatprep.subr.mxu0 0.0
      %269 = vmatpush1.msra.mxu0 %v233
      %270 = vmatprep.subr.mxu0 0.0
      %271 = vmatpush1.msra.mxu0 %v234
      %272 = vmatprep.subr.mxu0 0.0
      %273 = vmatpush1.msra.mxu0 %v235
      %274 = vmatprep.subr.mxu0 0.0
      %275 = vmatpush1.msra.mxu0 %v236
      %276 = vmatprep.subr.mxu0 0.0
      %277 = vmatpush1.msra.mxu0 0.0
      %278 = vmatprep.subr.mxu0 0.0
      %279 = vmatpush1.msra.mxu0 0.0
      %280 = vmatprep.subr.mxu0 0.0
      %281 = vmatpush1.msra.mxu0 0.0
      %282 = vmatprep.subr.mxu0 0.0
      %283 = vmatpush1.msra.mxu0 0.0
      %284 = vmatprep.subr.mxu0 0.0
      %285 = vmatpush1.msra.mxu0 0.0
      %286 = vmatprep.subr.mxu0 0.0
      %287 = vmatpush1.msra.mxu0 0.0
      %288 = vmatprep.subr.mxu0 0.0
      %289 = vmatpush1.msra.mxu0 0.0
      %290 = vmatprep.subr.mxu0 0.0
      %291 = vmatpush1.msra.mxu0 0.0
      %292 = vmatprep.subr.mxu0 0.0
      %293 = vmatpush1.msra.mxu0 0.0
      %294 = vmatprep.subr.mxu0 0.0
      %295 = vmatpush1.msra.mxu0 0.0
      %296 = vmatprep.subr.mxu0 0.0
      %297 = vmatpush1.msra.mxu0 0.0
      %298 = vmatprep.subr.mxu0 0.0
      %299 = vmatpush1.msra.mxu0 0.0
      %300 = vmatprep.subr.mxu0 0.0
      %301 = vmatpush1.msra.mxu0 0.0
      %302 = vmatprep.subr.mxu0 0.0
      %303 = vmatpush1.msra.mxu0 0.0
      %304 = vmatprep.subr.mxu0 0.0
      %305 = vmatpush1.msra.mxu0 0.0
      %306 = vmatprep.subr.mxu0 0.0
      %307 = vmatpush1.msra.mxu0 0.0
      %308 = vmatprep.mubr.f32.mxu0 0.0
      %309 = vmatmul.mubr.f32.gmra.mrb[0].mxu0 %v220
      %v310 = vpop.f32.mrb[0].mxu0
      %v311 = vadd.f32 %v242, %v310
      %v312 = vpop.f32.mrb[0].mxu0
      %313 = vdwg.mxu0
      %v314 = vmul.f32 %v311, %v311
      %v315 = vmul.f32 %v311, %v314
      %v316 = vmul.f32 %v315, 0.044715
      %v317 = vadd.f32 %v311, %v316
      %v318 = vmul.f32 %v317, 0.7978846
      %v319 = vtanh.pop %v318
      %v320 = vadd.f32 %v319, 1.0
      %v321 = vmul.f32 %v320, 0.5
      %v322 = vmul.f32 %v311, %v321
      %v323 = vld [vmem:[%s3] sm:$0xff]
      %v324 = vld [vmem:[%s3 + $0x8] sm:$0xff]
      %v325 = vld [vmem:[%s3 + $0x10] sm:$0xff]
      %v326 = vld [vmem:[%s3 + $0x18] sm:$0xff]
      %v327 = vld [vmem:[%s3 + $0x20] sm:$0xff]
      %v328 = vld [vmem:[%s3 + $0x28] sm:$0xff]
      %v329 = vld [vmem:[%s3 + $0x30] sm:$0xff]
      %v330 = vld [vmem:[%s3 + $0x38] sm:$0xff]
      %v331 = vld [vmem:[%s3 + $0x40] sm:$0xff]
      %v332 = vld [vmem:[%s3 + $0x48] sm:$0xff]
      %v333 = vld [vmem:[%s3 + $0x50] sm:$0xff]
      %v334 = vld [vmem:[%s3 + $0x58] sm:$0xff]
      %v335 = vld [vmem:[%s3 + $0x60] sm:$0xff]
      %v336 = vld [vmem:[%s3 + $0x68] sm:$0xff]
      %v337 = vld [vmem:[%s3 + $0x70] sm:$0xff]
      %v338 = vld [vmem:[%s3 + $0x78] sm:$0xff]
      %v339 = vld [vmem:[%s4] sm:$0x1]
      %v341 = vlaneseq
      %v342 = vshrl.u32 %v341, 7
      %v343 = vsub.s32 0, %v342
      %v344 = vrot.slane %v339, %v343
      %346 = vmatprep.subr.mxu0 0.0
      %347 = vmatpush1.msra.mxu0 %v323
      %348 = vmatprep.subr.mxu0 0.0
      %349 = vmatpush1.msra.mxu0 %v324
      %350 = vmatprep.subr.mxu0 0.0
      %351 = vmatpush1.msra.mxu0 %v325
      %352 = vmatprep.subr.mxu0 0.0
      %353 = vmatpush1.msra.mxu0 %v326
      %354 = vmatprep.subr.mxu0 0.0
      %355 = vmatpush1.msra.mxu0 %v327
      %356 = vmatprep.subr.mxu0 0.0
      %357 = vmatpush1.msra.mxu0 %v328
      %358 = vmatprep.subr.mxu0 0.0
      %359 = vmatpush1.msra.mxu0 %v329
      %360 = vmatprep.subr.mxu0 0.0
      %361 = vmatpush1.msra.mxu0 %v330
      %362 = vmatprep.subr.mxu0 0.0
      %363 = vmatpush1.msra.mxu0 %v331
      %364 = vmatprep.subr.mxu0 0.0
      %365 = vmatpush1.msra.mxu0 %v332
      %366 = vmatprep.subr.mxu0 0.0
      %367 = vmatpush1.msra.mxu0 %v333
      %368 = vmatprep.subr.mxu0 0.0
      %369 = vmatpush1.msra.mxu0 %v334
      %370 = vmatprep.subr.mxu0 0.0
      %371 = vmatpush1.msra.mxu0 %v335
      %372 = vmatprep.subr.mxu0 0.0
      %373 = vmatpush1.msra.mxu0 %v336
      %374 = vmatprep.subr.mxu0 0.0
      %375 = vmatpush1.msra.mxu0 %v337
      %376 = vmatprep.subr.mxu0 0.0
      %377 = vmatpush1.msra.mxu0 %v338
      %378 = vmatprep.subr.mxu0 0.0
      %379 = vmatpush1.msra.mxu0 0.0
      %380 = vmatprep.subr.mxu0 0.0
      %381 = vmatpush1.msra.mxu0 0.0
      %382 = vmatprep.subr.mxu0 0.0
      %383 = vmatpush1.msra.mxu0 0.0
      %384 = vmatprep.subr.mxu0 0.0
      %385 = vmatpush1.msra.mxu0 0.0
      %386 = vmatprep.subr.mxu0 0.0
      %387 = vmatpush1.msra.mxu0 0.0
      %388 = vmatprep.subr.mxu0 0.0
      %389 = vmatpush1.msra.mxu0 0.0
      %390 = vmatprep.subr.mxu0 0.0
      %391 = vmatpush1.msra.mxu0 0.0
      %392 = vmatprep.subr.mxu0 0.0
      %393 = vmatpush1.msra.mxu0 0.0
      %394 = vmatprep.subr.mxu0 0.0
      %395 = vmatpush1.msra.mxu0 0.0
      %396 = vmatprep.subr.mxu0 0.0
      %397 = vmatpush1.msra.mxu0 0.0
      %398 = vmatprep.subr.mxu0 0.0
      %399 = vmatpush1.msra.mxu0 0.0
      %400 = vmatprep.subr.mxu0 0.0
      %401 = vmatpush1.msra.mxu0 0.0
      %402 = vmatprep.subr.mxu0 0.0
      %403 = vmatpush1.msra.mxu0 0.0
      %404 = vmatprep.subr.mxu0 0.0
      %405 = vmatpush1.msra.mxu0 0.0
      %406 = vmatprep.subr.mxu0 0.0
      %407 = vmatpush1.msra.mxu0 0.0
      %408 = vmatprep.subr.mxu0 0.0
      %409 = vmatpush1.msra.mxu0 0.0
      %410 = vmatprep.mubr.f32.mxu0 0.0
      %411 = vmatmul.mubr.f32.gmra.mrb[0].mxu0 %v322
      %v412 = vpop.f32.mrb[0].mxu0
      %v413 = vadd.f32 %v344, %v412
      %v414 = vpop.f32.mrb[0].mxu0
      %415 = vdwg.mxu0
      %v416 = vadd.f32 %v220, %v413
      %417 = vst [vmem:[%s219] sm:$0xff] %v416
      %p418 = scmp.lt.s32.totalorder %s16, 1
      %s419 = scalar_select %p418, %s16, 1
      %s420 = smul.addr %s419, 8
      %s421 = scalar_lea.vmem %s5, %s420
      // Predicated region
      $region41: #{adapter_block.1} parent=39 // pred_check
        %p422 = pneg %p144
      $region42: #{adapter_block.1} parent=39 // pred_check_branch
        %424 = sbr.rel (%p422) target = $region44
      $region43: #{adapter_block.1} parent=39 // pred_region
        _
      $region44: #{adapter_block.1} parent=39 // pred_fallthru
        _
    $region40: #{adapter_block.1} parent=5 // pred_fallthru
      _
    %p425 = scmp.le.s32.totalorder 2, %s11
    // Predicated region
    $region45: #{adapter_block.1} parent=5 // pred_check
      %p426 = pneg %p425
    $region46: #{adapter_block.1} parent=5 // pred_check_branch
      %428 = sbr.rel (%p426) target = $region48
    $region47: #{adapter_block.1} parent=5 // pred_region
      %s429 = ssub.s32 %s11, 2
      // Predicated region
      $region49: #{adapter_block.1} parent=47 // pred_check
        %p430 = pneg %p150
      $region50: #{adapter_block.1} parent=47 // pred_check_branch
        %432 = sbr.rel (%p430) target = $region52
      $region51: #{adapter_block.1} parent=47 // pred_region
        %p433 = scmp.lt.s32.totalorder %s17, 1
        %s434 = scalar_select %p433, %s17, 1
        %s435 = smul.addr %s434, 8
        %s436 = scalar_lea.vmem %s5, %s435
      $region52: #{adapter_block.1} parent=47 // pred_fallthru
        _
    $region48: #{adapter_block.1} parent=5 // pred_fallthru
      _
  $region6: #{adapter_block.1} parent=0 // loop_footer
    %s15 = sadd.s32 1, %s11
  $region7: #{adapter_block.1} parent=0 // loop_footer_branch
    %10 = sbr.rel target = $region3
  $region8: #{adapter_block.1} parent=0 // loop_exit
    _

</llo_original>
